<compile_context>
chip_gen: v7x
topology: tpu7x:2x2x1
jax: 0.10.0
libtpu: 0.0.40
codegen_flags: <defaults>
</compile_context>

<pallas_src>
import functools

import jax
import jax.numpy as jnp
from jax.experimental import pallas as pl
from jax.experimental.pallas import tpu as pltpu


def _round_up(n, m):
    return ((n + m - 1) // m) * m


def _tpu_generation():
    """Best-effort TPU generation (5, 6, 7, ...) from device_kind; 0 if unknown."""
    try:
        kind = jax.devices()[0].device_kind.lower()
    except Exception:
        return 0
    for gen in (7, 6, 5, 4, 3, 2):
        if str(gen) in kind:
            return gen
    return 0


def _pick_batch_tile(B, P, *, want_multi_step):
    """Pick TB dividing B with TB % 8 == 0 (BlockSpec sublane rule), preferring
    TB*P >= 512 (keeps the 256-wide v6e/v7x MXU fed) and, when want_multi_step
    (v7x: 2 TensorCores), >= 2 grid steps so both cores / the pipeline are used."""
    cands = [t for t in range(8, B + 1, 8) if B % t == 0]
    if not cands:
        return B                                  # tiny batch: one block == full batch
    target = max(8, -(-512 // P))                 # ceil(512 / P)
    big = [t for t in cands if t >= target] or cands
    if want_multi_step:
        multi = [t for t in big if B // t >= 2]
        if multi:
            return max(multi)
    return max(big)


def _classifier_kernel(patches_ref, w_emb_ref, b_emb_ref, w_head_ref, b_head_ref,
                       logits_ref, *, elementwise_bf16):
    # patches: (TB, P, Dp)      f32 patch pixels (cast to bf16 in-kernel)
    # w_emb:   (Dp, De_pad)     bf16 patch-embed weight
    # b_emb:   (1, De_pad)      f32 patch-embed bias
    # w_head:  (De_pad, NC_pad) bf16 head weight
    # b_head:  (1, NC_pad)      f32 head bias
    TB, P, Dp = patches_ref.shape
    De = w_emb_ref.shape[1]

    # ---- image_encoder: patch embedding as one flat bf16 MXU matmul (f32 acc) ----
    x2d = patches_ref[...].reshape(TB * P, Dp).astype(jnp.bfloat16)   # in-kernel cast
    emb = jnp.dot(x2d, w_emb_ref[...], preferred_element_type=jnp.float32)
    emb = emb + b_emb_ref[...]                                        # (1, De) f32 broadcast
    if elementwise_bf16:                                              # v6e/v7x bf16 VPU/EUP
        emb = emb.astype(jnp.bfloat16)
    # TODO(synk): PyTorch nn.GELU defaults to exact erf-GELU; tanh-approx used here.
    act = jax.nn.gelu(emb, approximate=True)

    # ---- mean-pool over patches: cheap sublane reduction (no pooling matmul) ----
    feat = jnp.mean(act.reshape(TB, P, De), axis=1)                   # (TB, De)

    # ---- classification_head: Linear ----
    logits = jnp.dot(feat.astype(jnp.bfloat16), w_head_ref[...],
                     preferred_element_type=jnp.float32) + b_head_ref[...]
    logits_ref[...] = logits.astype(logits_ref.dtype)                 # lane-dense (TB, NC_pad)


@functools.partial(jax.jit, static_argnames=("patch", "batch_tile"))
def image_classifier(x_nchw, w_emb, b_emb, w_head, b_head, *, patch=4, batch_tile=None):
    """x_nchw: (B, C, H, W) float32 -> logits (B, num_classes)."""
    B, C, H, W = x_nchw.shape
    ph = pw = patch
    assert H % ph == 0 and W % pw == 0, "spatial dims must be divisible by patch size"
    Hp, Wp = H // ph, W // pw
    P = Hp * Wp
    Dp = C * ph * pw
    De = w_emb.shape[1]
    NC = w_head.shape[1]
    assert P % 8 == 0, "number of patches per image must be a multiple of 8"

    # NCHW -> (B, P, Dp) patches, kept f32 (no host pad/cast of the big tensor);
    # under jit this reshape+transpose+reshape is a single fused XLA copy.
    # TODO(synk): for realistic image sizes move patch extraction into the kernel
    # (grid over (B, Hp, Wp)) so this extra HBM read+write disappears.
    patches = x_nchw.reshape(B, C, Hp, ph, Wp, pw).transpose(0, 2, 4, 1, 3, 5)
    patches = patches.reshape(B, P, Dp)

    # Small weights/biases: pad lane dims to multiples of 128 (math-preserving:
    # padded rows/cols are zero) and cast matmul operands to bf16 once.
    De_pad = _round_up(De, 128)
    NC_pad = _round_up(NC, 128)
    w_emb_p = jnp.pad(w_emb, ((0, 0), (0, De_pad - De))).astype(jnp.bfloat16)
    b_emb_p = jnp.pad(b_emb.reshape(1, -1), ((0, 0), (0, De_pad - De))).astype(jnp.float32)
    w_head_p = jnp.pad(w_head, ((0, De_pad - De), (0, NC_pad - NC))).astype(jnp.bfloat16)
    b_head_p = jnp.pad(b_head.reshape(1, -1), ((0, 0), (0, NC_pad - NC))).astype(jnp.float32)

    # Generation-aware tuning.
    gen = _tpu_generation()
    elementwise_bf16 = gen >= 6                      # v6e/v7x: bf16 VPU/EUP; f32 on v5e
    if batch_tile is None:
        TB = _pick_batch_tile(B, P, want_multi_step=(gen >= 7))
    else:
        TB = batch_tile
    assert B % TB == 0, "batch_tile must divide the batch size"
    assert TB == B or TB % 8 == 0, \
        "batch_tile must be a multiple of 8 (sublane rule) or equal the full batch"
    grid = (B // TB,)

    # VMEM scoped budget: v5e/v6e are 128 MiB parts (bigger tiles amortize per-step
    # overhead); stay under the v7x-safe 32 MiB otherwise.
    vmem_limit = (96 if gen in (5, 6) else 32) * 1024 * 1024

    kernel = functools.partial(_classifier_kernel, elementwise_bf16=elementwise_bf16)

    out_pad = pl.pallas_call(
        kernel,
        out_shape=jax.ShapeDtypeStruct((B, NC_pad), jnp.float32),
        grid=grid,
        in_specs=[
            pl.BlockSpec((TB, P, Dp), lambda i: (i, 0, 0)),      # patches (tiled on batch)
            # Grid-invariant operands (constant index maps).
            # TODO(synk): single-buffer these (pipeline_mode) at realistic ViT dims.
            pl.BlockSpec((Dp, De_pad), lambda i: (0, 0)),        # w_emb
            pl.BlockSpec((1, De_pad), lambda i: (0, 0)),         # b_emb
            pl.BlockSpec((De_pad, NC_pad), lambda i: (0, 0)),    # w_head
            pl.BlockSpec((1, NC_pad), lambda i: (0, 0)),         # b_head
        ],
        out_specs=pl.BlockSpec((TB, NC_pad), lambda i: (i, 0)),
        compiler_params=pltpu.CompilerParams(
            dimension_semantics=("parallel",),
            vmem_limit_bytes=vmem_limit,
        ),
    )(patches, w_emb_p, b_emb_p, w_head_p, b_head_p)

    return out_pad[:, :NC]


def _reference(x, w_emb, b_emb, w_head, b_head, patch):
    """Pure-JAX f32 reference of the same forward pass."""
    B, C, H, W = x.shape
    xp = x.reshape(B, C, H // patch, patch, W // patch, patch).transpose(0, 2, 4, 1, 3, 5)
    patches = xp.reshape(B, -1, C * patch * patch)
    emb = jnp.einsum("bpd,de->bpe", patches, w_emb) + b_emb
    act = jax.nn.gelu(emb, approximate=True)
    feat = act.mean(axis=1)
    return feat @ w_head + b_head


if __name__ == "__main__":
    B, C, H, W = 2, 4, 16, 16
    patch = 4
    patch_dim = C * patch * patch      # 64
    embed_dim = 32
    num_classes = 8

    key = jax.random.PRNGKey(0)
    k_x, k_we, k_be, k_wh, k_bh = jax.random.split(key, 5)

    x = jax.random.normal(k_x, (B, C, H, W), dtype=jnp.float32)
    w_emb = 0.05 * jax.random.normal(k_we, (patch_dim, embed_dim), dtype=jnp.float32)
    b_emb = 0.01 * jax.random.normal(k_be, (embed_dim,), dtype=jnp.float32)
    w_head = 0.05 * jax.random.normal(k_wh, (embed_dim, num_classes), dtype=jnp.float32)
    b_head = 0.01 * jax.random.normal(k_bh, (num_classes,), dtype=jnp.float32)

    logits = image_classifier(x, w_emb, b_emb, w_head, b_head, patch=patch)
    jax.block_until_ready(logits)
    assert logits.shape == (B, num_classes)

    ref = _reference(x, w_emb, b_emb, w_head, b_head, patch)
    assert jnp.allclose(logits, ref, atol=3e-2, rtol=3e-2), "mismatch vs reference"

    print("KERNEL_OK")
</pallas_src>

<mosaic_0001>
module attributes {stable_mosaic.version = 11 : i64} {
  func.func @_classifier_kernel(%arg0: i32, %arg1: memref<2x16x64xf32, #tpu.memory_space<vmem>>, %arg2: memref<64x128xbf16, #tpu.memory_space<vmem>>, %arg3: memref<1x128xf32, #tpu.memory_space<vmem>>, %arg4: memref<128x128xbf16, #tpu.memory_space<vmem>>, %arg5: memref<1x128xf32, #tpu.memory_space<vmem>>, %arg6: memref<2x128xf32, #tpu.memory_space<vmem>>) attributes {dimension_semantics = [#tpu.dimension_semantics<parallel>], iteration_bounds = array<i64: 1>, scalar_prefetch = 0 : i64, scratch_operands = 0 : i64, tpu.core_type = #tpu.core_type<tc>, window_params = [{transform_indices = @transform_0, window_bounds = array<i64: 2, 16, 64>}, {pipeline_mode = #tpu.pipeline_mode<synchronous>, transform_indices = @transform_1, window_bounds = array<i64: 64, 128>}, {pipeline_mode = #tpu.pipeline_mode<synchronous>, transform_indices = @transform_2, window_bounds = array<i64: 1, 128>}, {pipeline_mode = #tpu.pipeline_mode<synchronous>, transform_indices = @transform_3, window_bounds = array<i64: 128, 128>}, {pipeline_mode = #tpu.pipeline_mode<synchronous>, transform_indices = @transform_4, window_bounds = array<i64: 1, 128>}, {transform_indices = @transform_5, window_bounds = array<i64: 2, 128>}]} {
    %c0 = arith.constant 0 : index
    %c0_0 = arith.constant 0 : index
    %c0_1 = arith.constant 0 : index
    %0 = vector.load %arg1[%c0, %c0_0, %c0_1] : memref<2x16x64xf32, #tpu.memory_space<vmem>>, vector<2x16x64xf32>
    %1 = vector.shape_cast %0 : vector<2x16x64xf32> to vector<32x64xf32>
    %2 = arith.truncf %1 : vector<32x64xf32> to vector<32x64xbf16>
    %c0_2 = arith.constant 0 : index
    %c0_3 = arith.constant 0 : index
    %3 = vector.load %arg2[%c0_2, %c0_3] : memref<64x128xbf16, #tpu.memory_space<vmem>>, vector<64x128xbf16>
    %cst = arith.constant dense<0.000000e+00> : vector<32x128xf32>
    %4 = tpu.matmul %2, %3, %cst {dimension_numbers = #tpu.dot_dimension_numbers<[1], [0], [0], [1], [0, 0, 1, 1], [], []>} : vector<32x64xbf16>, vector<64x128xbf16>, vector<32x128xf32> -> vector<32x128xf32>
    %c0_4 = arith.constant 0 : index
    %c0_5 = arith.constant 0 : index
    %5 = vector.load %arg3[%c0_4, %c0_5] : memref<1x128xf32, #tpu.memory_space<vmem>>, vector<1x128xf32>
    %6 = vector.broadcast %5 : vector<1x128xf32> to vector<32x128xf32>
    %7 = arith.addf %4, %6 : vector<32x128xf32>
    %8 = arith.mulf %7, %7 : vector<32x128xf32>
    %9 = arith.mulf %7, %8 : vector<32x128xf32>
    %cst_6 = arith.constant 4.471500e-02 : f32
    %10 = vector.broadcast %cst_6 : f32 to vector<32x128xf32>
    %11 = arith.mulf %10, %9 : vector<32x128xf32>
    %12 = arith.addf %7, %11 : vector<32x128xf32>
    %cst_7 = arith.constant 0.797884583 : f32
    %13 = vector.broadcast %cst_7 : f32 to vector<32x128xf32>
    %14 = arith.mulf %13, %12 : vector<32x128xf32>
    %15 = math.tanh %14 : vector<32x128xf32>
    %cst_8 = arith.constant 1.000000e+00 : f32
    %16 = vector.broadcast %cst_8 : f32 to vector<32x128xf32>
    %17 = arith.addf %16, %15 : vector<32x128xf32>
    %cst_9 = arith.constant 5.000000e-01 : f32
    %18 = vector.broadcast %cst_9 : f32 to vector<32x128xf32>
    %19 = arith.mulf %18, %17 : vector<32x128xf32>
    %20 = arith.mulf %7, %19 : vector<32x128xf32>
    %21 = vector.shape_cast %20 : vector<32x128xf32> to vector<2x16x128xf32>
    %cst_10 = arith.constant dense<0.000000e+00> : vector<2x128xf32>
    %22 = vector.multi_reduction <add>, %21, %cst_10 [1] : vector<2x16x128xf32> to vector<2x128xf32>
    %cst_11 = arith.constant 1.600000e+01 : f32
    %23 = vector.broadcast %cst_11 : f32 to vector<2x128xf32>
    %24 = arith.divf %22, %23 : vector<2x128xf32>
    %25 = arith.truncf %24 : vector<2x128xf32> to vector<2x128xbf16>
    %c0_12 = arith.constant 0 : index
    %c0_13 = arith.constant 0 : index
    %26 = vector.load %arg4[%c0_12, %c0_13] : memref<128x128xbf16, #tpu.memory_space<vmem>>, vector<128x128xbf16>
    %cst_14 = arith.constant dense<0.000000e+00> : vector<2x128xf32>
    %27 = tpu.matmul %25, %26, %cst_14 {dimension_numbers = #tpu.dot_dimension_numbers<[1], [0], [0], [1], [0, 0, 1, 1], [], []>} : vector<2x128xbf16>, vector<128x128xbf16>, vector<2x128xf32> -> vector<2x128xf32>
    %c0_15 = arith.constant 0 : index
    %c0_16 = arith.constant 0 : index
    %28 = vector.load %arg5[%c0_15, %c0_16] : memref<1x128xf32, #tpu.memory_space<vmem>>, vector<1x128xf32>
    %29 = vector.broadcast %28 : vector<1x128xf32> to vector<2x128xf32>
    %30 = arith.addf %27, %29 : vector<2x128xf32>
    %c0_17 = arith.constant 0 : index
    %c0_18 = arith.constant 0 : index
    %31 = vector.load %arg6[%c0_17, %c0_18] : memref<2x128xf32, #tpu.memory_space<vmem>>, vector<2x128xf32>
    tpu.vector_store %arg6[%c0_17, %c0_18], %30 {strides = array<i32>} : memref<2x128xf32, #tpu.memory_space<vmem>>, vector<2x128xf32>,
    return
  }
  func.func @transform_0(%arg0: i32) -> (i32, i32, i32) {
    %c0_i32 = arith.constant 0 : i32
    %c0_i32_0 = arith.constant 0 : i32
    %c0_i32_1 = arith.constant 0 : i32
    return %arg0, %c0_i32, %c0_i32_0 : i32, i32, i32
  }
  func.func @transform_1(%arg0: i32) -> (i32, i32) {
    %c0_i32 = arith.constant 0 : i32
    %c0_i32_0 = arith.constant 0 : i32
    %c0_i32_1 = arith.constant 0 : i32
    return %c0_i32, %c0_i32_0 : i32, i32
  }
  func.func @transform_2(%arg0: i32) -> (i32, i32) {
    %c0_i32 = arith.constant 0 : i32
    %c0_i32_0 = arith.constant 0 : i32
    %c0_i32_1 = arith.constant 0 : i32
    return %c0_i32, %c0_i32_0 : i32, i32
  }
  func.func @transform_3(%arg0: i32) -> (i32, i32) {
    %c0_i32 = arith.constant 0 : i32
    %c0_i32_0 = arith.constant 0 : i32
    %c0_i32_1 = arith.constant 0 : i32
    return %c0_i32, %c0_i32_0 : i32, i32
  }
  func.func @transform_4(%arg0: i32) -> (i32, i32) {
    %c0_i32 = arith.constant 0 : i32
    %c0_i32_0 = arith.constant 0 : i32
    %c0_i32_1 = arith.constant 0 : i32
    return %c0_i32, %c0_i32_0 : i32, i32
  }
  func.func @transform_5(%arg0: i32) -> (i32, i32) {
    %c0_i32 = arith.constant 0 : i32
    %c0_i32_0 = arith.constant 0 : i32
    return %arg0, %c0_i32 : i32, i32
  }
}

</mosaic_0001>

<llo_original>
// kernel: image_classifier.1
$region0: #{image_classifier.1}
  #allocation0 [shape = 'u32[]', space=smem, size = 0x4, offset = 0x4, fixed_abs, tag = 'smem constant byte address 0x4 - core index']
  #allocation1 [shape = 'u32[144,128]{1,0:T(1,128)}', space=vmem, size = 0x12000, scoped, tag = 'internal scratch']
  %s0 = inlined_call_operand.vmem [shape: f32[2,16,64], index: 0, kind: input, shape index: {}]
  %s1 = inlined_call_operand.vmem [shape: bf16[64,128], index: 1, kind: input, shape index: {}]
  %s2 = inlined_call_operand.vmem [shape: f32[1,128], index: 2, kind: input, shape index: {}]
  %s3 = inlined_call_operand.vmem [shape: bf16[128,128], index: 3, kind: input, shape index: {}]
  %s4 = inlined_call_operand.vmem [shape: f32[1,128], index: 4, kind: input, shape index: {}]
  %s5 = inlined_call_operand.hbm [shape: f32[2,128], index: 5, kind: output, shape index: {}]
  %s6 = sld [smem:[#allocation0]]
  $region30: #{image_classifier.1} parent=0
    _
  %s8 = ssub.s32 1, %s6
  %s9 = scalar_select 0, %s8, %s6
  $region1: #{image_classifier.1} parent=0
    #allocation2 [shape = 'u8[1024]{0}', space=vmem, size = 0x400, scoped, tag = 'output window, operand 0, single buffered']
    #allocation3 [shape = 's32[1]{0}', space=sflag, size = 0x4, scoped, tag = 'scoped memory for image_classifier.1']
    %10 = vsyncpa [#allocation3], 0
    // Predicated region
    $region2: #{image_classifier.1} parent=1 // pred_check
      _
    $region3: #{image_classifier.1} parent=1 // pred_check_branch
      %12 = sbr.rel (0) target = $region5
    $region4: #{image_classifier.1} parent=1 // pred_region
      _
    $region5: #{image_classifier.1} parent=1 // pred_fallthru
      _
    // Predicated region
    $region6: #{image_classifier.1} parent=1 // pred_check
      _
    $region7: #{image_classifier.1} parent=1 // pred_check_branch
      %14 = sbr.rel (0) target = $region9
    $region8: #{image_classifier.1} parent=1 // pred_region
      _
    $region9: #{image_classifier.1} parent=1 // pred_fallthru
      _
    // Predicated region
    $region10: #{image_classifier.1} parent=1 // pred_check
      _
    $region11: #{image_classifier.1} parent=1 // pred_check_branch
      %16 = sbr.rel (0) target = $region13
    $region12: #{image_classifier.1} parent=1 // pred_region
      _
    $region13: #{image_classifier.1} parent=1 // pred_fallthru
      _
    // Predicated region
    $region14: #{image_classifier.1} parent=1 // pred_check
      _
    $region15: #{image_classifier.1} parent=1 // pred_check_branch
      %18 = sbr.rel (0) target = $region17
    $region16: #{image_classifier.1} parent=1 // pred_region
      _
    $region17: #{image_classifier.1} parent=1 // pred_fallthru
      _
    // Predicated region
    $region18: #{image_classifier.1} parent=1 // pred_check
      _
    $region19: #{image_classifier.1} parent=1 // pred_check_branch
      %20 = sbr.rel (0) target = $region21
    $region20: #{image_classifier.1} parent=1 // pred_region
      _
    $region21: #{image_classifier.1} parent=1 // pred_fallthru
      _
    %v22 = vld [vmem:[%s0] sm:$0xff]
    %v23 = vld [vmem:[%s0 + $0x8] sm:$0xff]
    %v24 = vld [vmem:[%s0 + $0x10] sm:$0xff]
    %v25 = vld [vmem:[%s0 + $0x18] sm:$0xff]
    %v26 = vpack.c.bf16 %v23, %v22
    %v27 = vpack.c.bf16 %v25, %v24
    %v28 = vld [vmem:[%s1] sm:$0xf]
    %v29 = vld [vmem:[%s1 + $0x4] sm:$0xf]
    %v30 = vld [vmem:[%s1 + $0x8] sm:$0xf]
    %v31 = vld [vmem:[%s1 + $0xc] sm:$0xf]
    %v32 = vld [vmem:[%s1 + $0x10] sm:$0xf]
    %v33 = vld [vmem:[%s1 + $0x14] sm:$0xf]
    %v34 = vld [vmem:[%s1 + $0x18] sm:$0xf]
    %v35 = vld [vmem:[%s1 + $0x1c] sm:$0xf]
    %v36 = vld [vmem:[%s2] sm:$0x1]
    %v38 = vlaneseq
    %v39 = vshrl.u32 %v38, 7
    %v40 = vsub.s32 0, %v39
    %v41 = vrot.slane %v36, %v40
    %v51 = vunpack.c.l.b16 %v28
    %v52 = vunpack.c.l.b16 %v29
    %v53 = vunpack.c.l.b16 %v30
    %v54 = vunpack.c.l.b16 %v31
    %v55 = vunpack.c.l.b16 %v32
    %v56 = vunpack.c.l.b16 %v33
    %v57 = vunpack.c.l.b16 %v34
    %v58 = vunpack.c.l.b16 %v35
    %v59 = vpack.c.b16 %v52, %v51
    %v60 = vpack.c.b16 %v54, %v53
    %v61 = vpack.c.b16 %v56, %v55
    %v62 = vpack.c.b16 %v58, %v57
    %vm67 = vcmask 523264
    %v69 = vsel %vm67, %v26, 0
    %v72 = vsel %vm67, %v27, 0
    %74 = vmatprep.subr.bf16.mxu0 0
    %75 = vmatpush1.bf16.msra.mxu0 %v59
    %76 = vmatprep.subr.bf16.mxu0 0
    %77 = vmatpush1.bf16.msra.mxu0 %v60
    %78 = vmatprep.subr.bf16.mxu0 0
    %79 = vmatpush1.bf16.msra.mxu0 %v61
    %80 = vmatprep.subr.bf16.mxu0 0
    %81 = vmatpush1.bf16.msra.mxu0 %v62
    %82 = vmatprep.subr.bf16.mxu0 0
    %83 = vmatpush1.bf16.msra.mxu0 0
    %84 = vmatprep.subr.bf16.mxu0 0
    %85 = vmatpush1.bf16.msra.mxu0 0
    %86 = vmatprep.subr.bf16.mxu0 0
    %87 = vmatpush1.bf16.msra.mxu0 0
    %88 = vmatprep.subr.bf16.mxu0 0
    %89 = vmatpush1.bf16.msra.mxu0 0
    %90 = vmatprep.subr.bf16.mxu0 0
    %91 = vmatpush1.bf16.msra.mxu0 0
    %92 = vmatprep.subr.bf16.mxu0 0
    %93 = vmatpush1.bf16.msra.mxu0 0
    %94 = vmatprep.subr.bf16.mxu0 0
    %95 = vmatpush1.bf16.msra.mxu0 0
    %96 = vmatprep.subr.bf16.mxu0 0
    %97 = vmatpush1.bf16.msra.mxu0 0
    %98 = vmatprep.subr.bf16.mxu0 0
    %99 = vmatpush1.bf16.msra.mxu0 0
    %100 = vmatprep.subr.bf16.mxu0 0
    %101 = vmatpush1.bf16.msra.mxu0 0
    %102 = vmatprep.subr.bf16.mxu0 0
    %103 = vmatpush1.bf16.msra.mxu0 0
    %104 = vmatprep.subr.bf16.mxu0 0
    %105 = vmatpush1.bf16.msra.mxu0 0
    %106 = vmatprep.mubr.bf16.mxu0 0
    %107 = vmatmul.mubr.bf16.gmra.mrb[0].mxu0 %v69
    %v108 = vpop.f32.mrb[0].mxu0
    %v109 = vadd.f32 %v41, %v108
    %v110 = vpop.f32.mrb[0].mxu0
    %v111 = vpop.f32.mrb[0].mxu0
    %v112 = vadd.f32 %v41, %v111
    %v113 = vpop.f32.mrb[0].mxu0
    %114 = vmatprep.mubr.bf16.mxu0 0
    %115 = vmatmul.mubr.bf16.gmra.mrb[0].mxu0 %v72
    %v116 = vpop.f32.mrb[0].mxu0
    %v117 = vadd.f32 %v41, %v116
    %v118 = vpop.f32.mrb[0].mxu0
    %v119 = vpop.f32.mrb[0].mxu0
    %v120 = vadd.f32 %v41, %v119
    %v121 = vpop.f32.mrb[0].mxu0
    %122 = vdwg.mxu0
    %v123 = vmul.f32 %v109, %v109
    %v124 = vmul.f32 %v112, %v112
    %v125 = vmul.f32 %v117, %v117
    %v126 = vmul.f32 %v120, %v120
    %v127 = vmul.f32 %v109, %v123
    %v128 = vmul.f32 %v112, %v124
    %v129 = vmul.f32 %v117, %v125
    %v130 = vmul.f32 %v120, %v126
    %v131 = vmul.f32 %v127, 0.044715
    %v132 = vmul.f32 %v128, 0.044715
    %v133 = vmul.f32 %v129, 0.044715
    %v134 = vmul.f32 %v130, 0.044715
    %v135 = vadd.f32 %v109, %v131
    %v136 = vadd.f32 %v112, %v132
    %v137 = vadd.f32 %v117, %v133
    %v138 = vadd.f32 %v120, %v134
    %v139 = vmul.f32 %v135, 0.7978846
    %v140 = vmul.f32 %v136, 0.7978846
    %v141 = vmul.f32 %v137, 0.7978846
    %v142 = vmul.f32 %v138, 0.7978846
    %v143 = vtanh.pop %v139
    %v144 = vtanh.pop %v140
    %v145 = vtanh.pop %v141
    %v146 = vtanh.pop %v142
    %v147 = vadd.f32 %v143, 1.0
    %v148 = vadd.f32 %v144, 1.0
    %v149 = vadd.f32 %v145, 1.0
    %v150 = vadd.f32 %v146, 1.0
    %v151 = vmul.f32 %v147, 0.5
    %v152 = vmul.f32 %v148, 0.5
    %v153 = vmul.f32 %v149, 0.5
    %v154 = vmul.f32 %v150, 0.5
    %v155 = vmul.f32 %v109, %v151
    %v156 = vmul.f32 %v112, %v152
    %v157 = vmul.f32 %v117, %v153
    %v158 = vmul.f32 %v120, %v154
    %v159 = vadd.f32 %v155, %v156
    %v160 = vrot.slane %v159, 4
    %v161 = vadd.f32 %v159, %v160
    %v162 = vrot.slane %v161, 2
    %v163 = vadd.f32 %v161, %v162
    %v164 = vrot.slane %v163, 1
    %v165 = vadd.f32 %v163, %v164
    %v166 = vadd.f32 %v157, %v158
    %v167 = vrot.slane %v166, 4
    %v168 = vadd.f32 %v166, %v167
    %v169 = vrot.slane %v168, 2
    %v170 = vadd.f32 %v168, %v169
    %v171 = vrot.slane %v170, 1
    %v172 = vadd.f32 %v170, %v171
    %v173 = vrcp.pop 16.0
    %v174 = vmul.f32 %v165, %v173
    %v175 = vmul.f32 %v172, %v173
    %v176 = vpack.c.bf16 %v174, %v174
    %v177 = vpack.c.bf16 %v175, %v175
    %v178 = vld [vmem:[%s3] sm:$0xf]
    %v179 = vld [vmem:[%s3 + $0x4] sm:$0xf]
    %v180 = vld [vmem:[%s3 + $0x8] sm:$0xf]
    %v181 = vld [vmem:[%s3 + $0xc] sm:$0xf]
    %v182 = vld [vmem:[%s3 + $0x10] sm:$0xf]
    %v183 = vld [vmem:[%s3 + $0x14] sm:$0xf]
    %v184 = vld [vmem:[%s3 + $0x18] sm:$0xf]
    %v185 = vld [vmem:[%s3 + $0x1c] sm:$0xf]
    %v186 = vld [vmem:[%s3 + $0x20] sm:$0xf]
    %v187 = vld [vmem:[%s3 + $0x24] sm:$0xf]
    %v188 = vld [vmem:[%s3 + $0x28] sm:$0xf]
    %v189 = vld [vmem:[%s3 + $0x2c] sm:$0xf]
    %v190 = vld [vmem:[%s3 + $0x30] sm:$0xf]
    %v191 = vld [vmem:[%s3 + $0x34] sm:$0xf]
    %v192 = vld [vmem:[%s3 + $0x38] sm:$0xf]
    %v193 = vld [vmem:[%s3 + $0x3c] sm:$0xf]
    %v194 = vld [vmem:[%s4] sm:$0x1]
    %v196 = vlaneseq
    %v197 = vshrl.u32 %v196, 7
    %v198 = vsub.s32 0, %v197
    %v199 = vrot.slane %v194, %v198
    %v203 = vunpack.c.l.b16 %v176
    %v204 = vunpack.c.l.b16 %v177
    %vm205 = vcmask 1041409
    %v206 = vsel %vm205, %v204, %v203
    %v207 = vpack.c.b16 %v206, %v206
    %v225 = vunpack.c.l.b16 %v178
    %v226 = vunpack.c.l.b16 %v179
    %v227 = vunpack.c.l.b16 %v180
    %v228 = vunpack.c.l.b16 %v181
    %v229 = vunpack.c.l.b16 %v182
    %v230 = vunpack.c.l.b16 %v183
    %v231 = vunpack.c.l.b16 %v184
    %v232 = vunpack.c.l.b16 %v185
    %v233 = vunpack.c.l.b16 %v186
    %v234 = vunpack.c.l.b16 %v187
    %v235 = vunpack.c.l.b16 %v188
    %v236 = vunpack.c.l.b16 %v189
    %v237 = vunpack.c.l.b16 %v190
    %v238 = vunpack.c.l.b16 %v191
    %v239 = vunpack.c.l.b16 %v192
    %v240 = vunpack.c.l.b16 %v193
    %v241 = vpack.c.b16 %v226, %v225
    %v242 = vpack.c.b16 %v228, %v227
    %v243 = vpack.c.b16 %v230, %v229
    %v244 = vpack.c.b16 %v232, %v231
    %v245 = vpack.c.b16 %v234, %v233
    %v246 = vpack.c.b16 %v236, %v235
    %v247 = vpack.c.b16 %v238, %v237
    %v248 = vpack.c.b16 %v240, %v239
    %257 = vmatprep.subr.bf16.mxu0 0
    %258 = vmatpush1.bf16.msra.mxu0 %v241
    %259 = vmatprep.subr.bf16.mxu0 0
    %260 = vmatpush1.bf16.msra.mxu0 %v242
    %261 = vmatprep.subr.bf16.mxu0 0
    %262 = vmatpush1.bf16.msra.mxu0 %v243
    %263 = vmatprep.subr.bf16.mxu0 0
    %264 = vmatpush1.bf16.msra.mxu0 %v244
    %265 = vmatprep.subr.bf16.mxu0 0
    %266 = vmatpush1.bf16.msra.mxu0 %v245
    %267 = vmatprep.subr.bf16.mxu0 0
    %268 = vmatpush1.bf16.msra.mxu0 %v246
    %269 = vmatprep.subr.bf16.mxu0 0
    %270 = vmatpush1.bf16.msra.mxu0 %v247
    %271 = vmatprep.subr.bf16.mxu0 0
    %272 = vmatpush1.bf16.msra.mxu0 %v248
    %273 = vmatprep.subr.bf16.mxu0 0
    %274 = vmatpush1.bf16.msra.mxu0 0
    %275 = vmatprep.subr.bf16.mxu0 0
    %276 = vmatpush1.bf16.msra.mxu0 0
    %277 = vmatprep.subr.bf16.mxu0 0
    %278 = vmatpush1.bf16.msra.mxu0 0
    %279 = vmatprep.subr.bf16.mxu0 0
    %280 = vmatpush1.bf16.msra.mxu0 0
    %281 = vmatprep.subr.bf16.mxu0 0
    %282 = vmatpush1.bf16.msra.mxu0 0
    %283 = vmatprep.subr.bf16.mxu0 0
    %284 = vmatpush1.bf16.msra.mxu0 0
    %285 = vmatprep.subr.bf16.mxu0 0
    %286 = vmatpush1.bf16.msra.mxu0 0
    %287 = vmatprep.subr.bf16.mxu0 0
    %288 = vmatpush1.bf16.msra.mxu0 0
    %289 = vmatprep.mubr.bf16.mxu0 0
    %290 = vmatmul.mubr.bf16.gmra.mrb[0].mxu0 %v207
    %v291 = vpop.f32.mrb[0].mxu0
    %v292 = vadd.f32 %v199, %v291
    %v293 = vpop.f32.mrb[0].mxu0
    %v294 = vpop.f32.mrb[0].mxu0
    %v295 = vpop.f32.mrb[0].mxu0
    %296 = vdwg.mxu0
    %297 = vst [vmem:[#allocation2] sm:$0x3] %v292
    // Predicated region
    $region22: #{image_classifier.1} parent=1 // pred_check
      _
    $region23: #{image_classifier.1} parent=1 // pred_check_branch
      %299 = sbr.rel (0) target = $region25
    $region24: #{image_classifier.1} parent=1 // pred_region
      %s301 = ssub.s32 32, 32
      %302 = vsyncadd [#allocation3], %s301
      %s304 = sshll.u32 [#allocation2], 4
      %s305 = int_to_ptr.vmem [resolvable:$true] %s304
      %307 = dma.vmem_to_hbm [thread:$0]  %s305, 32, %s5, [#allocation3]
    $region25: #{image_classifier.1} parent=1 // pred_fallthru
      _
    // Predicated region
    $region26: #{image_classifier.1} parent=1 // pred_check
      _
    $region27: #{image_classifier.1} parent=1 // pred_check_branch
      %309 = sbr.rel (0) target = $region29
    $region28: #{image_classifier.1} parent=1 // pred_region
      %310 = dma.done [#allocation3], 32
    $region29: #{image_classifier.1} parent=1 // pred_fallthru
      _
    %311 = vsyncpa [#allocation3], 1

</llo_original>
